<compile_context>
chip_gen: v7x
topology: tpu7x:2x2x1
jax: 0.10.0
libtpu: 0.0.40
codegen_flags: <defaults>
</compile_context>

<pallas_src>
import jax
import jax.numpy as jnp
from jax.experimental import pallas as pl
from jax.experimental.pallas import tpu as pltpu


def _round_up(x, m):
    return ((x + m - 1) // m) * m


def _lstm_cell_kernel(x_ref, h_ref, c_ref, wx_ref, wh_ref, b_ref,
                      c_out_ref, h_out_ref):
    n_h = c_ref.shape[-1]

    # Two accumulating MXU matmuls (no wrapper concat needed) + folded bias.
    pre = (
        jnp.dot(x_ref[...], wx_ref[...], preferred_element_type=jnp.float32)
        + jnp.dot(h_ref[...], wh_ref[...], preferred_element_type=jnp.float32)
        + b_ref[...]
    )

    # Single lane-dense tanh (EUP) pass over the whole (i, f, o, g) slab.
    # The 0.5 pre-scale of the sigmoid lanes is already folded into Wx/Wh/b,
    # so:  sigmoid(z) = 0.5 * tanh(pre) + 0.5  on lanes [0, 3*n_h),
    #      tanh(z)    =       tanh(pre)        on lanes [3*n_h, 4*n_h).
    t = jnp.tanh(pre)
    sig = t[:, :3 * n_h] * 0.5 + 0.5

    i_t = sig[:, 0 * n_h:1 * n_h]
    f_t = sig[:, 1 * n_h:2 * n_h]
    o_t = sig[:, 2 * n_h:3 * n_h]
    g_t = t[:, 3 * n_h:4 * n_h]

    c_t = f_t * c_ref[...] + i_t * g_t
    h_t = o_t * jnp.tanh(c_t)

    c_out_ref[...] = c_t.astype(c_out_ref.dtype)
    h_out_ref[...] = h_t.astype(h_out_ref.dtype)


def lstm_cell_forward(x, c, h, wx, wh, b, *, tm_max=2048):
    """x: [S, A, n_in], c/h: [S, A, n_h],
    wx: [n_in, 4*n_h], wh: [n_h, 4*n_h], b: [1, 4*n_h] (pre-scale folded).
    Returns (c_t, h_t), each [S, A, n_h]."""
    S, A, n_in = x.shape
    n_h = h.shape[-1]
    M = S * A

    x2 = x.reshape(M, n_in)
    h2 = h.reshape(M, n_h)
    c2 = c.reshape(M, n_h)

    # Row tile: at least 2 grid steps when possible (so the "parallel" axis
    # spans both TensorCores on v7x), capped by tm_max; no wrapper padding —
    # the ragged last block is masked by Pallas.
    tm = max(8, min(tm_max, _round_up(pl.cdiv(M, 2), 8)))
    grid = (pl.cdiv(M, tm),)

    out_dtype = c.dtype

    c_t, h_t = pl.pallas_call(
        _lstm_cell_kernel,
        out_shape=(
            jax.ShapeDtypeStruct((M, n_h), out_dtype),
            jax.ShapeDtypeStruct((M, n_h), out_dtype),
        ),
        grid=grid,
        in_specs=[
            # Streamed row tiles.
            pl.BlockSpec((tm, n_in), lambda i: (i, 0)),
            pl.BlockSpec((tm, n_h), lambda i: (i, 0)),
            pl.BlockSpec((tm, n_h), lambda i: (i, 0)),
            # Resident weights / bias (constant block index -> DMA'd once).
            pl.BlockSpec((n_in, 4 * n_h), lambda i: (0, 0)),
            pl.BlockSpec((n_h, 4 * n_h), lambda i: (0, 0)),
            pl.BlockSpec((1, 4 * n_h), lambda i: (0, 0)),
        ],
        out_specs=(
            pl.BlockSpec((tm, n_h), lambda i: (i, 0)),
            pl.BlockSpec((tm, n_h), lambda i: (i, 0)),
        ),
        compiler_params=pltpu.CompilerParams(
            dimension_semantics=("parallel",),      # megacore sharding on v7x
            vmem_limit_bytes=32 * 1024 * 1024,      # safe on v5e/v6e/v7x
        ),
    )(x2, h2, c2, wx, wh, b)

    return c_t.reshape(S, A, n_h), h_t.reshape(S, A, n_h)


def init_params(key, n_in=16, n_h=32, dtype=jnp.float32):
    """Synthetic params for the 8 nn.Linear layers (torch layout: W [out,in], b [out])."""
    names = ["ii", "hi", "if", "hf", "ig", "hg", "io", "ho"]
    keys = jax.random.split(key, 2 * len(names))
    params = {}
    for idx, name in enumerate(names):
        fan_in = n_in if name[0] == "i" else n_h
        bound = 1.0 / (fan_in ** 0.5)
        w = jax.random.uniform(keys[2 * idx], (n_h, fan_in), dtype,
                               minval=-bound, maxval=bound)
        bb = jax.random.uniform(keys[2 * idx + 1], (n_h,), dtype,
                                minval=-bound, maxval=bound)
        params[name] = (w, bb)
    return params


def pack_params(params, n_in, n_h):
    """Pack the 8 Linear layers for the kernel.

    Gate order along lanes is (i, f, o, g).  The 0.5 pre-scale of the exact
    sigmoid identity  sigmoid(z) = 0.5*tanh(0.5*z) + 0.5  is folded into the
    weights/bias of the three sigmoid gates so the kernel only needs one tanh
    pass plus an affine on the sigmoid slab."""
    gate_order = ["i", "f", "o", "g"]
    wx_cols, wh_cols, b_cols = [], [], []
    for g in gate_order:
        w_i, b_i = params["i" + g]     # input  -> hidden
        w_h, b_h = params["h" + g]     # hidden -> hidden
        pre = 0.5 if g != "g" else 1.0
        wx_cols.append(pre * w_i.T)    # [n_in, n_h]
        wh_cols.append(pre * w_h.T)    # [n_h, n_h]
        b_cols.append(pre * (b_i + b_h))
    wx = jnp.concatenate(wx_cols, axis=-1)           # [n_in, 4*n_h]
    wh = jnp.concatenate(wh_cols, axis=-1)           # [n_h,  4*n_h]
    b = jnp.concatenate(b_cols, axis=-1)[None, :]    # [1,    4*n_h]
    return wx, wh, b


def reference_forward(x, c, h, params):
    """Pure-JAX reference matching torch LSTMCell module semantics."""
    def lin(name, inp):
        w, b = params[name]
        return inp @ w.T + b

    i_t = jax.nn.sigmoid(lin("ii", x) + lin("hi", h))
    f_t = jax.nn.sigmoid(lin("if", x) + lin("hf", h))
    g_t = jnp.tanh(lin("ig", x) + lin("hg", h))
    o_t = jax.nn.sigmoid(lin("io", x) + lin("ho", h))
    c_t = f_t * c + i_t * g_t
    h_t = o_t * jnp.tanh(c_t)
    return c_t, h_t


if __name__ == "__main__":
    n_in, n_h = 16, 32
    num_sims, num_atoms = 2, 8

    key = jax.random.PRNGKey(0)
    k_x, k_c, k_h, k_p = jax.random.split(key, 4)

    x = jax.random.normal(k_x, (num_sims, num_atoms, n_in), jnp.float32)
    c = jax.random.normal(k_c, (num_sims, num_atoms, n_h), jnp.float32)
    h = jax.random.normal(k_h, (num_sims, num_atoms, n_h), jnp.float32)

    params = init_params(k_p, n_in, n_h)
    wx, wh, b = pack_params(params, n_in, n_h)

    c_t, h_t = lstm_cell_forward(x, c, h, wx, wh, b)
    jax.block_until_ready((c_t, h_t))

    c_ref, h_ref = reference_forward(x, c, h, params)
    assert jnp.allclose(c_t, c_ref, atol=1e-5, rtol=1e-5)
    assert jnp.allclose(h_t, h_ref, atol=1e-5, rtol=1e-5)

    print("KERNEL_OK")
</pallas_src>

<mosaic_0001>
module attributes {stable_mosaic.version = 11 : i64} {
  func.func @_lstm_cell_kernel(%arg0: i32, %arg1: memref<8x16xf32, #tpu.memory_space<vmem>>, %arg2: memref<8x32xf32, #tpu.memory_space<vmem>>, %arg3: memref<8x32xf32, #tpu.memory_space<vmem>>, %arg4: memref<16x128xf32, #tpu.memory_space<vmem>>, %arg5: memref<32x128xf32, #tpu.memory_space<vmem>>, %arg6: memref<1x128xf32, #tpu.memory_space<vmem>>, %arg7: memref<8x32xf32, #tpu.memory_space<vmem>>, %arg8: memref<8x32xf32, #tpu.memory_space<vmem>>) attributes {dimension_semantics = [#tpu.dimension_semantics<parallel>], iteration_bounds = array<i64: 2>, scalar_prefetch = 0 : i64, scratch_operands = 0 : i64, tpu.core_type = #tpu.core_type<tc>, window_params = [{transform_indices = @transform_0, window_bounds = array<i64: 8, 16>}, {transform_indices = @transform_1, window_bounds = array<i64: 8, 32>}, {transform_indices = @transform_2, window_bounds = array<i64: 8, 32>}, {pipeline_mode = #tpu.pipeline_mode<synchronous>, transform_indices = @transform_3, window_bounds = array<i64: 16, 128>}, {pipeline_mode = #tpu.pipeline_mode<synchronous>, transform_indices = @transform_4, window_bounds = array<i64: 32, 128>}, {pipeline_mode = #tpu.pipeline_mode<synchronous>, transform_indices = @transform_5, window_bounds = array<i64: 1, 128>}, {transform_indices = @transform_6, window_bounds = array<i64: 8, 32>}, {transform_indices = @transform_7, window_bounds = array<i64: 8, 32>}]} {
    %c0 = arith.constant 0 : index
    %c0_0 = arith.constant 0 : index
    %0 = vector.load %arg1[%c0, %c0_0] : memref<8x16xf32, #tpu.memory_space<vmem>>, vector<8x16xf32>
    %c0_1 = arith.constant 0 : index
    %c0_2 = arith.constant 0 : index
    %1 = vector.load %arg4[%c0_1, %c0_2] : memref<16x128xf32, #tpu.memory_space<vmem>>, vector<16x128xf32>
    %cst = arith.constant dense<0.000000e+00> : vector<8x128xf32>
    %2 = tpu.matmul %0, %1, %cst {dimension_numbers = #tpu.dot_dimension_numbers<[1], [0], [0], [1], [0, 0, 1, 1], [], []>} : vector<8x16xf32>, vector<16x128xf32>, vector<8x128xf32> -> vector<8x128xf32>
    %c0_3 = arith.constant 0 : index
    %c0_4 = arith.constant 0 : index
    %3 = vector.load %arg2[%c0_3, %c0_4] : memref<8x32xf32, #tpu.memory_space<vmem>>, vector<8x32xf32>
    %c0_5 = arith.constant 0 : index
    %c0_6 = arith.constant 0 : index
    %4 = vector.load %arg5[%c0_5, %c0_6] : memref<32x128xf32, #tpu.memory_space<vmem>>, vector<32x128xf32>
    %cst_7 = arith.constant dense<0.000000e+00> : vector<8x128xf32>
    %5 = tpu.matmul %3, %4, %cst_7 {dimension_numbers = #tpu.dot_dimension_numbers<[1], [0], [0], [1], [0, 0, 1, 1], [], []>} : vector<8x32xf32>, vector<32x128xf32>, vector<8x128xf32> -> vector<8x128xf32>
    %6 = arith.addf %2, %5 : vector<8x128xf32>
    %c0_8 = arith.constant 0 : index
    %c0_9 = arith.constant 0 : index
    %7 = vector.load %arg6[%c0_8, %c0_9] : memref<1x128xf32, #tpu.memory_space<vmem>>, vector<1x128xf32>
    %8 = vector.broadcast %7 : vector<1x128xf32> to vector<8x128xf32>
    %9 = arith.addf %6, %8 : vector<8x128xf32>
    %10 = math.tanh %9 : vector<8x128xf32>
    %11 = vector.extract_strided_slice %10 {offsets = [0, 0], sizes = [8, 96], strides = [1, 1]} : vector<8x128xf32> to vector<8x96xf32>
    %cst_10 = arith.constant 5.000000e-01 : f32
    %12 = vector.broadcast %cst_10 : f32 to vector<8x96xf32>
    %13 = arith.mulf %11, %12 : vector<8x96xf32>
    %cst_11 = arith.constant 5.000000e-01 : f32
    %14 = vector.broadcast %cst_11 : f32 to vector<8x96xf32>
    %15 = arith.addf %13, %14 : vector<8x96xf32>
    %16 = vector.extract_strided_slice %15 {offsets = [0, 0], sizes = [8, 32], strides = [1, 1]} : vector<8x96xf32> to vector<8x32xf32>
    %17 = vector.extract_strided_slice %15 {offsets = [0, 32], sizes = [8, 32], strides = [1, 1]} : vector<8x96xf32> to vector<8x32xf32>
    %18 = vector.extract_strided_slice %15 {offsets = [0, 64], sizes = [8, 32], strides = [1, 1]} : vector<8x96xf32> to vector<8x32xf32>
    %19 = vector.extract_strided_slice %10 {offsets = [0, 96], sizes = [8, 32], strides = [1, 1]} : vector<8x128xf32> to vector<8x32xf32>
    %c0_12 = arith.constant 0 : index
    %c0_13 = arith.constant 0 : index
    %20 = vector.load %arg3[%c0_12, %c0_13] : memref<8x32xf32, #tpu.memory_space<vmem>>, vector<8x32xf32>
    %21 = arith.mulf %17, %20 : vector<8x32xf32>
    %22 = arith.mulf %16, %19 : vector<8x32xf32>
    %23 = arith.addf %21, %22 : vector<8x32xf32>
    %24 = math.tanh %23 : vector<8x32xf32>
    %25 = arith.mulf %18, %24 : vector<8x32xf32>
    %c0_14 = arith.constant 0 : index
    %c0_15 = arith.constant 0 : index
    %26 = vector.load %arg7[%c0_14, %c0_15] : memref<8x32xf32, #tpu.memory_space<vmem>>, vector<8x32xf32>
    tpu.vector_store %arg7[%c0_14, %c0_15], %23 {strides = array<i32>} : memref<8x32xf32, #tpu.memory_space<vmem>>, vector<8x32xf32>,
    %c0_16 = arith.constant 0 : index
    %c0_17 = arith.constant 0 : index
    %27 = vector.load %arg8[%c0_16, %c0_17] : memref<8x32xf32, #tpu.memory_space<vmem>>, vector<8x32xf32>
    tpu.vector_store %arg8[%c0_16, %c0_17], %25 {strides = array<i32>} : memref<8x32xf32, #tpu.memory_space<vmem>>, vector<8x32xf32>,
    return
  }
  func.func @transform_0(%arg0: i32) -> (i32, i32) {
    %c0_i32 = arith.constant 0 : i32
    %c0_i32_0 = arith.constant 0 : i32
    return %arg0, %c0_i32 : i32, i32
  }
  func.func @transform_1(%arg0: i32) -> (i32, i32) {
    %c0_i32 = arith.constant 0 : i32
    %c0_i32_0 = arith.constant 0 : i32
    return %arg0, %c0_i32 : i32, i32
  }
  func.func @transform_2(%arg0: i32) -> (i32, i32) {
    %c0_i32 = arith.constant 0 : i32
    %c0_i32_0 = arith.constant 0 : i32
    return %arg0, %c0_i32 : i32, i32
  }
  func.func @transform_3(%arg0: i32) -> (i32, i32) {
    %c0_i32 = arith.constant 0 : i32
    %c0_i32_0 = arith.constant 0 : i32
    %c0_i32_1 = arith.constant 0 : i32
    return %c0_i32, %c0_i32_0 : i32, i32
  }
  func.func @transform_4(%arg0: i32) -> (i32, i32) {
    %c0_i32 = arith.constant 0 : i32
    %c0_i32_0 = arith.constant 0 : i32
    %c0_i32_1 = arith.constant 0 : i32
    return %c0_i32, %c0_i32_0 : i32, i32
  }
  func.func @transform_5(%arg0: i32) -> (i32, i32) {
    %c0_i32 = arith.constant 0 : i32
    %c0_i32_0 = arith.constant 0 : i32
    %c0_i32_1 = arith.constant 0 : i32
    return %c0_i32, %c0_i32_0 : i32, i32
  }
  func.func @transform_6(%arg0: i32) -> (i32, i32) {
    %c0_i32 = arith.constant 0 : i32
    %c0_i32_0 = arith.constant 0 : i32
    return %arg0, %c0_i32 : i32, i32
  }
  func.func @transform_7(%arg0: i32) -> (i32, i32) {
    %c0_i32 = arith.constant 0 : i32
    %c0_i32_0 = arith.constant 0 : i32
    return %arg0, %c0_i32 : i32, i32
  }
}

</mosaic_0001>

<llo_original>
// kernel: tpu_custom_call.1
$region0: #{tpu_custom_call.1}
  #allocation0 [shape = 'u32[]', space=smem, size = 0x4, offset = 0x4, fixed_abs, tag = 'smem constant byte address 0x4 - core index']
  #allocation1 [shape = 'u32[144,128]{1,0:T(1,128)}', space=vmem, size = 0x12000, scoped, tag = 'internal scratch']
  %s0 = inlined_call_operand.hbm [shape: f32[16,16], index: 0, kind: input, shape index: {}]
  %s1 = inlined_call_operand.hbm [shape: f32[16,32], index: 1, kind: input, shape index: {}]
  %s2 = inlined_call_operand.hbm [shape: f32[16,32], index: 2, kind: input, shape index: {}]
  %s3 = inlined_call_operand.hbm [shape: f32[16,128], index: 3, kind: input, shape index: {}]
  %s4 = inlined_call_operand.hbm [shape: f32[32,128], index: 4, kind: input, shape index: {}]
  %s5 = inlined_call_operand.vmem [shape: f32[1,128], index: 5, kind: input, shape index: {}]
  %s6 = inlined_call_operand.hbm [shape: f32[16,32], index: 6, kind: output, shape index: {0}]
  %s7 = inlined_call_operand.hbm [shape: f32[16,32], index: 7, kind: output, shape index: {1}]
  %8 = xla_tuple %s6, %s7
  %s9 = sld [smem:[#allocation0]]
  $region85: #{tpu_custom_call.1} parent=0
    _
  %s11 = ssub.s32 1, %s9
  %s12 = scalar_select 0, %s11, %s9
  $region1: #{tpu_custom_call.1} parent=0
    #allocation2 [shape = 'u8[8192]{0}', space=vmem, size = 0x2000, scoped, tag = 'input window, operand 0']
    #allocation3 [shape = 's32[2]{0}', space=sflag, size = 0x8, scoped, tag = 'scoped memory for tpu_custom_call.1']
    #allocation4 [shape = 's32[2]{0}', space=sflag, size = 0x8, scoped, tag = 'scoped memory for tpu_custom_call.1']
    #allocation5 [shape = 'u8[8192]{0}', space=vmem, size = 0x2000, scoped, tag = 'input window, operand 1']
    #allocation6 [shape = 's32[2]{0}', space=sflag, size = 0x8, scoped, tag = 'scoped memory for tpu_custom_call.1']
    #allocation7 [shape = 'u8[8192]{0}', space=vmem, size = 0x2000, scoped, tag = 'input window, operand 2']
    #allocation8 [shape = 'u8[8192]{0}', space=vmem, size = 0x2000, scoped, tag = 'input window, operand 3, single buffered']
    #allocation9 [shape = 's32[1]{0}', space=sflag, size = 0x4, scoped, tag = 'scoped memory for tpu_custom_call.1']
    #allocation10 [shape = 'u8[16384]{0}', space=vmem, size = 0x4000, scoped, tag = 'input window, operand 4, single buffered']
    #allocation11 [shape = 'u8[8192]{0}', space=vmem, size = 0x2000, scoped, tag = 'output window, operand 0']
    #allocation12 [shape = 'u8[8192]{0}', space=vmem, size = 0x2000, scoped, tag = 'output window, operand 1']
    #allocation13 [shape = 's32[2]{0}', space=sflag, size = 0x8, scoped, tag = 'scoped memory for tpu_custom_call.1']
    %13 = vsyncpa [#allocation3], 0
    %s14 = scalar_lea.sflag [#allocation3], 1
    %15 = vsyncpa %s14, 0
    %16 = vsyncpa [#allocation6], 0
    %s17 = scalar_lea.sflag [#allocation6], 1
    %18 = vsyncpa %s17, 0
    %19 = vsyncpa [#allocation9], 0
    %20 = vsyncpa [#allocation4], 0
    %s21 = scalar_lea.sflag [#allocation4], 1
    %22 = vsyncpa %s21, 0
    %23 = vsyncpa [#allocation13], 0
    %s24 = scalar_lea.sflag [#allocation13], 1
    %25 = vsyncpa %s24, 0
    loop: start=0, step=1, limit=4
    $region2: #{tpu_custom_call.1} parent=1 // loop_pre_header
      _
    $region3: #{tpu_custom_call.1} parent=1 // loop_header
      %s27 = sphi 0, %s31
      %p28 = scmp.ge.s32.totalorder %s27, 4
      %s37 = sphi 0, %s39
      %s40 = sphi 0, %s37
      %s41 = sphi 0, %s40
      %s57 = sphi 0, %s41
      %s63 = sphi 0, %s65
      %s66 = sphi 0, %s63
      %s67 = sphi 0, %s66
      %s83 = sphi 0, %s67
      %s89 = sphi 0, %s91
      %s92 = sphi 0, %s89
      %s93 = sphi 0, %s92
      %s109 = sphi 0, %s93
      %s113 = sphi 0, %s113
      %s115 = sphi 0, %s113
      %s116 = sphi 0, %s115
      %s130 = sphi 0, %s116
      %s134 = sphi 0, %s134
      %s136 = sphi 0, %s134
      %s137 = sphi 0, %s136
      %s151 = sphi 0, %s137
      %s155 = sphi 0, %s155
      %s157 = sphi 0, %s155
      %s158 = sphi 0, %s157
      %s172 = sphi 0, %s158
      %s178 = sphi 0, %s180
      %s181 = sphi 0, %s178
      %s182 = sphi 0, %s181
      %s198 = sphi 0, %s182
      %s204 = sphi 0, %s206
      %s207 = sphi 0, %s204
      %s208 = sphi 0, %s207
      %s224 = sphi 0, %s208
    $region4: #{tpu_custom_call.1} parent=1 // loop_header_branch
      %30 = sbr.rel (%p28) target = $region8
    $region5: #{tpu_custom_call.1} parent=1 // loop_body
      %s32 = ssub.s32 %s27, 1
      %s33 = ssub.s32 %s27, 2
      %s34 = sadd.s32 %s27, 1
      %s35 = ssub.s32 %s27, %s34
      %p36 = scmp.eq.s32.totalorder %s35, 0
      %s38 = sadd.s32 %s37, 1
      %s39 = scalar_select %p36, %s37, %s38
      %p42 = pneg %p36
      %p43 = scmp.eq.s32.totalorder %s27, 1
      %p44 = por %p42, %p43
      %p45 = scmp.ne.s32.totalorder %s37, %s40
      %p46 = scmp.eq.s32.totalorder %s27, 0
      %p47 = por %p45, %p46
      %p48 = scmp.ne.s32.totalorder %s37, %s40
      %p49 = scmp.eq.s32.totalorder %s32, 1
      %p50 = por %p48, %p49
      %p51 = scmp.ne.s32.totalorder %s40, %s41
      %p52 = scmp.eq.s32.totalorder %s32, 0
      %p53 = por %p51, %p52
      %p54 = scmp.ne.s32.totalorder %s40, %s41
      %p55 = scmp.eq.s32.totalorder %s33, 1
      %p56 = por %p54, %p55
      %p58 = scmp.ne.s32.totalorder %s41, %s57
      %p59 = scmp.eq.s32.totalorder %s33, 0
      %p60 = por %p58, %p59
      %s61 = ssub.s32 %s27, %s34
      %p62 = scmp.eq.s32.totalorder %s61, 0
      %s64 = sadd.s32 %s63, 1
      %s65 = scalar_select %p62, %s63, %s64
      %p68 = pneg %p62
      %p69 = scmp.eq.s32.totalorder %s27, 1
      %p70 = por %p68, %p69
      %p71 = scmp.ne.s32.totalorder %s63, %s66
      %p72 = scmp.eq.s32.totalorder %s27, 0
      %p73 = por %p71, %p72
      %p74 = scmp.ne.s32.totalorder %s63, %s66
      %p75 = scmp.eq.s32.totalorder %s32, 1
      %p76 = por %p74, %p75
      %p77 = scmp.ne.s32.totalorder %s66, %s67
      %p78 = scmp.eq.s32.totalorder %s32, 0
      %p79 = por %p77, %p78
      %p80 = scmp.ne.s32.totalorder %s66, %s67
      %p81 = scmp.eq.s32.totalorder %s33, 1
      %p82 = por %p80, %p81
      %p84 = scmp.ne.s32.totalorder %s67, %s83
      %p85 = scmp.eq.s32.totalorder %s33, 0
      %p86 = por %p84, %p85
      %s87 = ssub.s32 %s27, %s34
      %p88 = scmp.eq.s32.totalorder %s87, 0
      %s90 = sadd.s32 %s89, 1
      %s91 = scalar_select %p88, %s89, %s90
      %p94 = pneg %p88
      %p95 = scmp.eq.s32.totalorder %s27, 1
      %p96 = por %p94, %p95
      %p97 = scmp.ne.s32.totalorder %s89, %s92
      %p98 = scmp.eq.s32.totalorder %s27, 0
      %p99 = por %p97, %p98
      %p100 = scmp.ne.s32.totalorder %s89, %s92
      %p101 = scmp.eq.s32.totalorder %s32, 1
      %p102 = por %p100, %p101
      %p103 = scmp.ne.s32.totalorder %s92, %s93
      %p104 = scmp.eq.s32.totalorder %s32, 0
      %p105 = por %p103, %p104
      %p106 = scmp.ne.s32.totalorder %s92, %s93
      %p107 = scmp.eq.s32.totalorder %s33, 1
      %p108 = por %p106, %p107
      %p110 = scmp.ne.s32.totalorder %s93, %s109
      %p111 = scmp.eq.s32.totalorder %s33, 0
      %p112 = por %p110, %p111
      %s114 = sadd.s32 %s113, 1
      %p117 = scmp.eq.s32.totalorder %s27, 1
      %p118 = scmp.ne.s32.totalorder %s113, %s115
      %p119 = scmp.eq.s32.totalorder %s27, 0
      %p120 = por %p118, %p119
      %p121 = scmp.ne.s32.totalorder %s113, %s115
      %p122 = scmp.eq.s32.totalorder %s32, 1
      %p123 = por %p121, %p122
      %p124 = scmp.ne.s32.totalorder %s115, %s116
      %p125 = scmp.eq.s32.totalorder %s32, 0
      %p126 = por %p124, %p125
      %p127 = scmp.ne.s32.totalorder %s115, %s116
      %p128 = scmp.eq.s32.totalorder %s33, 1
      %p129 = por %p127, %p128
      %p131 = scmp.ne.s32.totalorder %s116, %s130
      %p132 = scmp.eq.s32.totalorder %s33, 0
      %p133 = por %p131, %p132
      %s135 = sadd.s32 %s134, 1
      %p138 = scmp.eq.s32.totalorder %s27, 1
      %p139 = scmp.ne.s32.totalorder %s134, %s136
      %p140 = scmp.eq.s32.totalorder %s27, 0
      %p141 = por %p139, %p140
      %p142 = scmp.ne.s32.totalorder %s134, %s136
      %p143 = scmp.eq.s32.totalorder %s32, 1
      %p144 = por %p142, %p143
      %p145 = scmp.ne.s32.totalorder %s136, %s137
      %p146 = scmp.eq.s32.totalorder %s32, 0
      %p147 = por %p145, %p146
      %p148 = scmp.ne.s32.totalorder %s136, %s137
      %p149 = scmp.eq.s32.totalorder %s33, 1
      %p150 = por %p148, %p149
      %p152 = scmp.ne.s32.totalorder %s137, %s151
      %p153 = scmp.eq.s32.totalorder %s33, 0
      %p154 = por %p152, %p153
      %s156 = sadd.s32 %s155, 1
      %p159 = scmp.eq.s32.totalorder %s27, 1
      %p160 = scmp.ne.s32.totalorder %s155, %s157
      %p161 = scmp.eq.s32.totalorder %s27, 0
      %p162 = por %p160, %p161
      %p163 = scmp.ne.s32.totalorder %s155, %s157
      %p164 = scmp.eq.s32.totalorder %s32, 1
      %p165 = por %p163, %p164
      %p166 = scmp.ne.s32.totalorder %s157, %s158
      %p167 = scmp.eq.s32.totalorder %s32, 0
      %p168 = por %p166, %p167
      %p169 = scmp.ne.s32.totalorder %s157, %s158
      %p170 = scmp.eq.s32.totalorder %s33, 1
      %p171 = por %p169, %p170
      %p173 = scmp.ne.s32.totalorder %s158, %s172
      %p174 = scmp.eq.s32.totalorder %s33, 0
      %p175 = por %p173, %p174
      %s176 = ssub.s32 %s27, %s34
      %p177 = scmp.eq.s32.totalorder %s176, 0
      %s179 = sadd.s32 %s178, 1
      %s180 = scalar_select %p177, %s178, %s179
      %p183 = pneg %p177
      %p184 = scmp.eq.s32.totalorder %s27, 1
      %p185 = por %p183, %p184
      %p186 = scmp.ne.s32.totalorder %s178, %s181
      %p187 = scmp.eq.s32.totalorder %s27, 0
      %p188 = por %p186, %p187
      %p189 = scmp.ne.s32.totalorder %s178, %s181
      %p190 = scmp.eq.s32.totalorder %s32, 1
      %p191 = por %p189, %p190
      %p192 = scmp.ne.s32.totalorder %s181, %s182
      %p193 = scmp.eq.s32.totalorder %s32, 0
      %p194 = por %p192, %p193
      %p195 = scmp.ne.s32.totalorder %s181, %s182
      %p196 = scmp.eq.s32.totalorder %s33, 1
      %p197 = por %p195, %p196
      %p199 = scmp.ne.s32.totalorder %s182, %s198
      %p200 = scmp.eq.s32.totalorder %s33, 0
      %p201 = por %p199, %p200
      %s202 = ssub.s32 %s27, %s34
      %p203 = scmp.eq.s32.totalorder %s202, 0
      %s205 = sadd.s32 %s204, 1
      %s206 = scalar_select %p203, %s204, %s205
      %p209 = pneg %p203
      %p210 = scmp.eq.s32.totalorder %s27, 1
      %p211 = por %p209, %p210
      %p212 = scmp.ne.s32.totalorder %s204, %s207
      %p213 = scmp.eq.s32.totalorder %s27, 0
      %p214 = por %p212, %p213
      %p215 = scmp.ne.s32.totalorder %s204, %s207
      %p216 = scmp.eq.s32.totalorder %s32, 1
      %p217 = por %p215, %p216
      %p218 = scmp.ne.s32.totalorder %s207, %s208
      %p219 = scmp.eq.s32.totalorder %s32, 0
      %p220 = por %p218, %p219
      %p221 = scmp.ne.s32.totalorder %s207, %s208
      %p222 = scmp.eq.s32.totalorder %s33, 1
      %p223 = por %p221, %p222
      %p225 = scmp.ne.s32.totalorder %s208, %s224
      %p226 = scmp.eq.s32.totalorder %s33, 0
      %p227 = por %p225, %p226
      %p228 = scmp.le.s32.totalorder 1, %s27
      %p229 = scmp.lt.s32.totalorder %s27, 3
      %p230 = pnand %p228, %p229
      %p231 = pneg %p230
      // Predicated region
      $region9: #{tpu_custom_call.1} parent=5 // pred_check
        _
      $region10: #{tpu_custom_call.1} parent=5 // pred_check_branch
        %233 = sbr.rel (%p230) target = $region12
      $region11: #{tpu_custom_call.1} parent=5 // pred_region
        %s234 = ssub.s32 %s27, 1
        // Predicated region
        $region13: #{tpu_custom_call.1} parent=11 // pred_check
          %p235 = pneg %p126
        $region14: #{tpu_custom_call.1} parent=11 // pred_check_branch
          %237 = sbr.rel (%p235) target = $region16
        $region15: #{tpu_custom_call.1} parent=11 // pred_region
          %s239 = ssub.s32 256, 256
          %240 = vsyncadd [#allocation9], %s239
          %s241 = sshll.u32 [#allocation8], 4
          %s242 = int_to_ptr.vmem [resolvable:$true] %s241
          %247 = dma.hbm_to_vmem [thread:$0]  %s3, 256, %s242, [#allocation9], 128, 128, 8
        $region16: #{tpu_custom_call.1} parent=11 // pred_fallthru
          _
        // Predicated region
        $region17: #{tpu_custom_call.1} parent=11 // pred_check
          %p248 = pneg %p147
        $region18: #{tpu_custom_call.1} parent=11 // pred_check_branch
          %250 = sbr.rel (%p248) target = $region20
        $region19: #{tpu_custom_call.1} parent=11 // pred_region
          %s252 = ssub.s32 512, 512
          %253 = vsyncadd [#allocation9], %s252
          %s254 = sshll.u32 [#allocation10], 4
          %s255 = int_to_ptr.vmem [resolvable:$true] %s254
          %260 = dma.hbm_to_vmem [thread:$0]  %s4, 512, %s255, [#allocation9], 128, 128, 8
        $region20: #{tpu_custom_call.1} parent=11 // pred_fallthru
          _
        // Predicated region
        $region21: #{tpu_custom_call.1} parent=11 // pred_check
          %p261 = pneg %p168
        $region22: #{tpu_custom_call.1} parent=11 // pred_check_branch
          %263 = sbr.rel (%p261) target = $region24
        $region23: #{tpu_custom_call.1} parent=11 // pred_region
          _
        $region24: #{tpu_custom_call.1} parent=11 // pred_fallthru
          _
      $region12: #{tpu_custom_call.1} parent=5 // pred_fallthru
        _
      %p264 = scmp.lt.s32.totalorder %s27, 2
      // Predicated region
      $region25: #{tpu_custom_call.1} parent=5 // pred_check
        %p265 = pneg %p264
      $region26: #{tpu_custom_call.1} parent=5 // pred_check_branch
        %267 = sbr.rel (%p265) target = $region28
      $region27: #{tpu_custom_call.1} parent=5 // pred_region
        // Predicated region
        $region29: #{tpu_custom_call.1} parent=27 // pred_check
          %p268 = pneg %p47
        $region30: #{tpu_custom_call.1} parent=27 // pred_check_branch
          %270 = sbr.rel (%p268) target = $region32
        $region31: #{tpu_custom_call.1} parent=27 // pred_region
          %s271 = sand.u32 %s37, 1
          %s272 = scalar_lea.sflag [#allocation3], %s271
          %s273 = sand.u32 %s37, 1
          %s274 = smul.addr %s273, 8
          %s275 = scalar_lea.vmem [#allocation2], %s274
          %s277 = ssub.s32 128, 128
          %278 = vsyncadd %s272, %s277
          %s279 = smul.addr %s27, 128
          %s280 = scalar_lea.hbm %s0, %s279
          %s282 = sshll.u32 %s275, 4
          %s283 = int_to_ptr.vmem [resolvable:$true] %s282
          %285 = dma.hbm_to_vmem [thread:$0]  %s280, 128, %s283, %s272
        $region32: #{tpu_custom_call.1} parent=27 // pred_fallthru
          _
        // Predicated region
        $region33: #{tpu_custom_call.1} parent=27 // pred_check
          %p286 = pneg %p73
        $region34: #{tpu_custom_call.1} parent=27 // pred_check_branch
          %288 = sbr.rel (%p286) target = $region36
        $region35: #{tpu_custom_call.1} parent=27 // pred_region
          %s289 = sand.u32 %s27, 1
          %s290 = scalar_lea.sflag [#allocation6], %s289
          %s291 = sand.u32 %s63, 1
          %s292 = smul.addr %s291, 8
          %s293 = scalar_lea.vmem [#allocation5], %s292
          %s295 = ssub.s32 128, 128
          %296 = vsyncadd %s290, %s295
          %s297 = smul.addr %s27, 128
          %s298 = scalar_lea.hbm %s1, %s297
          %s300 = sshll.u32 %s293, 4
          %s301 = int_to_ptr.vmem [resolvable:$true] %s300
          %303 = dma.hbm_to_vmem [thread:$0]  %s298, 128, %s301, %s290
        $region36: #{tpu_custom_call.1} parent=27 // pred_fallthru
          _
        // Predicated region
        $region37: #{tpu_custom_call.1} parent=27 // pred_check
          %p304 = pneg %p99
        $region38: #{tpu_custom_call.1} parent=27 // pred_check_branch
          %306 = sbr.rel (%p304) target = $region40
        $region39: #{tpu_custom_call.1} parent=27 // pred_region
          %s307 = sand.u32 %s27, 1
          %s308 = scalar_lea.sflag [#allocation6], %s307
          %s309 = sand.u32 %s89, 1
          %s310 = smul.addr %s309, 8
          %s311 = scalar_lea.vmem [#allocation7], %s310
          %s313 = ssub.s32 128, 128
          %314 = vsyncadd %s308, %s313
          %s315 = smul.addr %s27, 128
          %s316 = scalar_lea.hbm %s2, %s315
          %s318 = sshll.u32 %s311, 4
          %s319 = int_to_ptr.vmem [resolvable:$true] %s318
          %321 = dma.hbm_to_vmem [thread:$0]  %s316, 128, %s319, %s308
        $region40: #{tpu_custom_call.1} parent=27 // pred_fallthru
          _
      $region28: #{tpu_custom_call.1} parent=5 // pred_fallthru
        _
      %p322 = scmp.le.s32.totalorder 1, %s27
      %p323 = scmp.lt.s32.totalorder %s27, 3
      %p324 = pnand %p322, %p323
      %p325 = pneg %p324
      // Predicated region
      $region41: #{tpu_custom_call.1} parent=5 // pred_check
        _
      $region42: #{tpu_custom_call.1} parent=5 // pred_check_branch
        %327 = sbr.rel (%p324) target = $region44
      $region43: #{tpu_custom_call.1} parent=5 // pred_region
        %s328 = ssub.s32 %s27, 1
        %s329 = sand.u32 %s40, 1
        %s330 = scalar_lea.sflag [#allocation3], %s329
        %s331 = sand.u32 %s40, 1
        %s332 = smul.addr %s331, 8
        %s333 = scalar_lea.vmem [#allocation2], %s332
        // Predicated region
        $region45: #{tpu_custom_call.1} parent=43 // pred_check
          %p334 = pneg %p53
        $region46: #{tpu_custom_call.1} parent=43 // pred_check_branch
          %336 = sbr.rel (%p334) target = $region48
        $region47: #{tpu_custom_call.1} parent=43 // pred_region
          %337 = dma.done %s330, 128
        $region48: #{tpu_custom_call.1} parent=43 // pred_fallthru
          _
        %s338 = sand.u32 %s32, 1
        %s339 = scalar_lea.sflag [#allocation6], %s338
        %s340 = sand.u32 %s66, 1
        %s341 = smul.addr %s340, 8
        %s342 = scalar_lea.vmem [#allocation5], %s341
        // Predicated region
        $region49: #{tpu_custom_call.1} parent=43 // pred_check
          %p343 = pneg %p79
        $region50: #{tpu_custom_call.1} parent=43 // pred_check_branch
          %345 = sbr.rel (%p343) target = $region52
        $region51: #{tpu_custom_call.1} parent=43 // pred_region
          %346 = dma.done %s339, 128
        $region52: #{tpu_custom_call.1} parent=43 // pred_fallthru
          _
        %s347 = sand.u32 %s32, 1
        %s348 = scalar_lea.sflag [#allocation6], %s347
        %s349 = sand.u32 %s92, 1
        %s350 = smul.addr %s349, 8
        %s351 = scalar_lea.vmem [#allocation7], %s350
        // Predicated region
        $region53: #{tpu_custom_call.1} parent=43 // pred_check
          %p352 = pneg %p105
        $region54: #{tpu_custom_call.1} parent=43 // pred_check_branch
          %354 = sbr.rel (%p352) target = $region56
        $region55: #{tpu_custom_call.1} parent=43 // pred_region
          %355 = dma.done %s348, 128
        $region56: #{tpu_custom_call.1} parent=43 // pred_fallthru
          _
        // Predicated region
        $region57: #{tpu_custom_call.1} parent=43 // pred_check
          %p356 = pneg %p126
        $region58: #{tpu_custom_call.1} parent=43 // pred_check_branch
          %358 = sbr.rel (%p356) target = $region60
        $region59: #{tpu_custom_call.1} parent=43 // pred_region
          %359 = dma.done [#allocation9], 256
        $region60: #{tpu_custom_call.1} parent=43 // pred_fallthru
          _
        // Predicated region
        $region61: #{tpu_custom_call.1} parent=43 // pred_check
          %p360 = pneg %p147
        $region62: #{tpu_custom_call.1} parent=43 // pred_check_branch
          %362 = sbr.rel (%p360) target = $region64
        $region63: #{tpu_custom_call.1} parent=43 // pred_region
          %363 = dma.done [#allocation9], 512
        $region64: #{tpu_custom_call.1} parent=43 // pred_fallthru
          _
        %s364 = sand.u32 %s40, 1
        %s365 = scalar_lea.sflag [#allocation3], %s364
        %s366 = sand.u32 %s40, 1
        %s367 = smul.addr %s366, 8
        %s368 = scalar_lea.vmem [#allocation2], %s367
        %p369 = pneg %p53
        %p370 = pneg %p50
        %s371 = sand.u32 %s32, 1
        %s372 = scalar_lea.sflag [#allocation6], %s371
        %s373 = sand.u32 %s66, 1
        %s374 = smul.addr %s373, 8
        %s375 = scalar_lea.vmem [#allocation5], %s374
        %p376 = pneg %p79
        %p377 = pneg %p76
        %s378 = sand.u32 %s32, 1
        %s379 = scalar_lea.sflag [#allocation6], %s378
        %s380 = sand.u32 %s92, 1
        %s381 = smul.addr %s380, 8
        %s382 = scalar_lea.vmem [#allocation7], %s381
        %p383 = pneg %p105
        %p384 = pneg %p102
        %p385 = pneg %p126
        %p386 = pneg %p123
        %p387 = pneg %p147
        %p388 = pneg %p144
        %p389 = pneg %p168
        %p390 = pneg %p165
        %p391 = pneg %p194
        %p392 = pneg %p191
        %s393 = sand.u32 %s181, 1
        %s394 = scalar_lea.sflag [#allocation4], %s393
        %s395 = sand.u32 %s181, 1
        %s396 = smul.addr %s395, 8
        %s397 = scalar_lea.vmem [#allocation11], %s396
        %p398 = pneg %p220
        %p399 = pneg %p217
        %s400 = sand.u32 %s207, 1
        %s401 = scalar_lea.sflag [#allocation13], %s400
        %s402 = sand.u32 %s207, 1
        %s403 = smul.addr %s402, 8
        %s404 = scalar_lea.vmem [#allocation12], %s403
        %v405 = vld [vmem:[%s333] sm:$0xff]
        %v406 = vld [vmem:[#allocation8] sm:$0xff]
        %v407 = vld [vmem:[#allocation8 + $0x8] sm:$0xff]
        %v408 = vld [vmem:[%s342] sm:$0xff]
        %v409 = vld [vmem:[#allocation10] sm:$0xff]
        %v410 = vld [vmem:[#allocation10 + $0x8] sm:$0xff]
        %v411 = vld [vmem:[#allocation10 + $0x10] sm:$0xff]
        %v412 = vld [vmem:[#allocation10 + $0x18] sm:$0xff]
        %vm413 = vcmask 261120
        %v415 = vsel %vm413, %v408, 0
        %417 = vmatprep.subr.mxu0 0.0
        %418 = vmatpush1.msra.mxu0 %v409
        %419 = vmatprep.subr.mxu0 0.0
        %420 = vmatpush1.msra.mxu0 %v410
        %421 = vmatprep.subr.mxu0 0.0
        %422 = vmatpush1.msra.mxu0 %v411
        %423 = vmatprep.subr.mxu0 0.0
        %424 = vmatpush1.msra.mxu0 %v412
        %425 = vmatprep.subr.mxu0 0.0
        %426 = vmatpush1.msra.mxu0 0.0
        %427 = vmatprep.subr.mxu0 0.0
        %428 = vmatpush1.msra.mxu0 0.0
        %429 = vmatprep.subr.mxu0 0.0
        %430 = vmatpush1.msra.mxu0 0.0
        %431 = vmatprep.subr.mxu0 0.0
        %432 = vmatpush1.msra.mxu0 0.0
        %433 = vmatprep.subr.mxu0 0.0
        %434 = vmatpush1.msra.mxu0 0.0
        %435 = vmatprep.subr.mxu0 0.0
        %436 = vmatpush1.msra.mxu0 0.0
        %437 = vmatprep.subr.mxu0 0.0
        %438 = vmatpush1.msra.mxu0 0.0
        %439 = vmatprep.subr.mxu0 0.0
        %440 = vmatpush1.msra.mxu0 0.0
        %441 = vmatprep.subr.mxu0 0.0
        %442 = vmatpush1.msra.mxu0 0.0
        %443 = vmatprep.subr.mxu0 0.0
        %444 = vmatpush1.msra.mxu0 0.0
        %445 = vmatprep.subr.mxu0 0.0
        %446 = vmatpush1.msra.mxu0 0.0
        %447 = vmatprep.subr.mxu0 0.0
        %448 = vmatpush1.msra.mxu0 0.0
        %449 = vmatprep.subr.mxu0 0.0
        %450 = vmatpush1.msra.mxu0 0.0
        %451 = vmatprep.subr.mxu0 0.0
        %452 = vmatpush1.msra.mxu0 0.0
        %453 = vmatprep.subr.mxu0 0.0
        %454 = vmatpush1.msra.mxu0 0.0
        %455 = vmatprep.subr.mxu0 0.0
        %456 = vmatpush1.msra.mxu0 0.0
        %457 = vmatprep.subr.mxu0 0.0
        %458 = vmatpush1.msra.mxu0 0.0
        %459 = vmatprep.subr.mxu0 0.0
        %460 = vmatpush1.msra.mxu0 0.0
        %461 = vmatprep.subr.mxu0 0.0
        %462 = vmatpush1.msra.mxu0 0.0
        %463 = vmatprep.subr.mxu0 0.0
        %464 = vmatpush1.msra.mxu0 0.0
        %465 = vmatprep.subr.mxu0 0.0
        %466 = vmatpush1.msra.mxu0 0.0
        %467 = vmatprep.subr.mxu0 0.0
        %468 = vmatpush1.msra.mxu0 0.0
        %469 = vmatprep.subr.mxu0 0.0
        %470 = vmatpush1.msra.mxu0 0.0
        %471 = vmatprep.subr.mxu0 0.0
        %472 = vmatpush1.msra.mxu0 0.0
        %473 = vmatprep.subr.mxu0 0.0
        %474 = vmatpush1.msra.mxu0 0.0
        %475 = vmatprep.subr.mxu0 0.0
        %476 = vmatpush1.msra.mxu0 0.0
        %477 = vmatprep.subr.mxu0 0.0
        %478 = vmatpush1.msra.mxu0 0.0
        %479 = vmatprep.subr.mxu0 0.0
        %480 = vmatpush1.msra.mxu0 0.0
        %481 = vmatprep.mubr.f32.mxu0 0.0
        %482 = vmatmul.mubr.f32.gmra.mrb[0].mxu0 %v415
        %v483 = vpop.f32.mrb[0].mxu0
        %v484 = vadd.f32 0.0, %v483
        %v485 = vpop.f32.mrb[0].mxu0
        %486 = vdwg.mxu0
        %vm487 = vcmask 130048
        %v489 = vsel %vm487, %v405, 0
        %491 = vmatprep.subr.mxu0 0.0
        %492 = vmatpush1.msra.mxu0 %v406
        %493 = vmatprep.subr.mxu0 0.0
        %494 = vmatpush1.msra.mxu0 %v407
        %495 = vmatprep.subr.mxu0 0.0
        %496 = vmatpush1.msra.mxu0 0.0
        %497 = vmatprep.subr.mxu0 0.0
        %498 = vmatpush1.msra.mxu0 0.0
        %499 = vmatprep.subr.mxu0 0.0
        %500 = vmatpush1.msra.mxu0 0.0
        %501 = vmatprep.subr.mxu0 0.0
        %502 = vmatpush1.msra.mxu0 0.0
        %503 = vmatprep.subr.mxu0 0.0
        %504 = vmatpush1.msra.mxu0 0.0
        %505 = vmatprep.subr.mxu0 0.0
        %506 = vmatpush1.msra.mxu0 0.0
        %507 = vmatprep.subr.mxu0 0.0
        %508 = vmatpush1.msra.mxu0 0.0
        %509 = vmatprep.subr.mxu0 0.0
        %510 = vmatpush1.msra.mxu0 0.0
        %511 = vmatprep.subr.mxu0 0.0
        %512 = vmatpush1.msra.mxu0 0.0
        %513 = vmatprep.subr.mxu0 0.0
        %514 = vmatpush1.msra.mxu0 0.0
        %515 = vmatprep.subr.mxu0 0.0
        %516 = vmatpush1.msra.mxu0 0.0
        %517 = vmatprep.subr.mxu0 0.0
        %518 = vmatpush1.msra.mxu0 0.0
        %519 = vmatprep.subr.mxu0 0.0
        %520 = vmatpush1.msra.mxu0 0.0
        %521 = vmatprep.subr.mxu0 0.0
        %522 = vmatpush1.msra.mxu0 0.0
        %523 = vmatprep.subr.mxu0 0.0
        %524 = vmatpush1.msra.mxu0 0.0
        %525 = vmatprep.subr.mxu0 0.0
        %526 = vmatpush1.msra.mxu0 0.0
        %527 = vmatprep.subr.mxu0 0.0
        %528 = vmatpush1.msra.mxu0 0.0
        %529 = vmatprep.subr.mxu0 0.0
        %530 = vmatpush1.msra.mxu0 0.0
        %531 = vmatprep.subr.mxu0 0.0
        %532 = vmatpush1.msra.mxu0 0.0
        %533 = vmatprep.subr.mxu0 0.0
        %534 = vmatpush1.msra.mxu0 0.0
        %535 = vmatprep.subr.mxu0 0.0
        %536 = vmatpush1.msra.mxu0 0.0
        %537 = vmatprep.subr.mxu0 0.0
        %538 = vmatpush1.msra.mxu0 0.0
        %539 = vmatprep.subr.mxu0 0.0
        %540 = vmatpush1.msra.mxu0 0.0
        %541 = vmatprep.subr.mxu0 0.0
        %542 = vmatpush1.msra.mxu0 0.0
        %543 = vmatprep.subr.mxu0 0.0
        %544 = vmatpush1.msra.mxu0 0.0
        %545 = vmatprep.subr.mxu0 0.0
        %546 = vmatpush1.msra.mxu0 0.0
        %547 = vmatprep.subr.mxu0 0.0
        %548 = vmatpush1.msra.mxu0 0.0
        %549 = vmatprep.subr.mxu0 0.0
        %550 = vmatpush1.msra.mxu0 0.0
        %551 = vmatprep.subr.mxu0 0.0
        %552 = vmatpush1.msra.mxu0 0.0
        %553 = vmatprep.subr.mxu0 0.0
        %554 = vmatpush1.msra.mxu0 0.0
        %555 = vmatprep.mubr.f32.mxu0 0.0
        %556 = vmatmul.mubr.f32.gmra.mrb[0].mxu0 %v489
        %v557 = vpop.f32.mrb[0].mxu0
        %v558 = vadd.f32 %v484, %v557
        %v559 = vpop.f32.mrb[0].mxu0
        %560 = vdwg.mxu0
        %v561 = vld [vmem:[%s5] sm:$0x1]
        %v563 = vlaneseq
        %v564 = vshrl.u32 %v563, 7
        %v565 = vsub.s32 0, %v564
        %v566 = vrot.slane %v561, %v565
        %v568 = vadd.f32 %v558, %v566
        %v569 = vtanh.pop %v568
        %v570 = vmul.f32 %v569, 0.5
        %v571 = vadd.f32 %v570, 0.5
        %v572 = vld [vmem:[%s351] sm:$0xff]
        %574 = vrot.lane.b32.xlu0 %v572, 32
        %v575 = vpop.permute.xlu0 %574
        %v577 = vmul.f32 %v571, %v575
        %579 = vrot.lane.b32.xlu0 %v569, 32
        %v580 = vpop.permute.xlu0 %579
        %v582 = vmul.f32 %v571, %v580
        %584 = vrot.lane.b32.xlu0 %v582, 32
        %v585 = vpop.permute.xlu0 %584
        %v587 = vadd.f32 %v577, %v585
        %v588 = vtanh.pop %v587
        %590 = vrot.lane.b32.xlu0 %v588, 32
        %v591 = vpop.permute.xlu0 %590
        %v593 = vmul.f32 %v571, %v591
        %595 = vrot.lane.b32.xlu0 %v587, 96
        %v596 = vpop.permute.xlu0 %595
        %598 = vst.msk [vmem:[%s397] sm:$0xff] %vm413, %v596
        %600 = vrot.lane.b32.xlu0 %v593, 64
        %v601 = vpop.permute.xlu0 %600
        %603 = vst.msk [vmem:[%s404] sm:$0xff] %vm413, %v601
        %s604 = sand.u32 %s181, 1
        %s605 = scalar_lea.sflag [#allocation4], %s604
        %s606 = sand.u32 %s181, 1
        %s607 = smul.addr %s606, 8
        %s608 = scalar_lea.vmem [#allocation11], %s607
        %s609 = sand.u32 %s207, 1
        %s610 = scalar_lea.sflag [#allocation13], %s609
        %s611 = sand.u32 %s207, 1
        %s612 = smul.addr %s611, 8
        %s613 = scalar_lea.vmem [#allocation12], %s612
        // Predicated region
        $region65: #{tpu_custom_call.1} parent=43 // pred_check
          %p614 = pneg %p191
        $region66: #{tpu_custom_call.1} parent=43 // pred_check_branch
          %616 = sbr.rel (%p614) target = $region68
        $region67: #{tpu_custom_call.1} parent=43 // pred_region
          %s618 = ssub.s32 128, 128
          %619 = vsyncadd %s605, %s618
          %s620 = smul.addr %s32, 128
          %s621 = scalar_lea.hbm %s6, %s620
          %s623 = sshll.u32 %s608, 4
          %s624 = int_to_ptr.vmem [resolvable:$true] %s623
          %626 = dma.vmem_to_hbm [thread:$0]  %s624, 128, %s621, %s605
        $region68: #{tpu_custom_call.1} parent=43 // pred_fallthru
          _
        // Predicated region
        $region69: #{tpu_custom_call.1} parent=43 // pred_check
          %p627 = pneg %p217
        $region70: #{tpu_custom_call.1} parent=43 // pred_check_branch
          %629 = sbr.rel (%p627) target = $region72
        $region71: #{tpu_custom_call.1} parent=43 // pred_region
          %s631 = ssub.s32 128, 128
          %632 = vsyncadd %s610, %s631
          %s633 = smul.addr %s32, 128
          %s634 = scalar_lea.hbm %s7, %s633
          %s636 = sshll.u32 %s613, 4
          %s637 = int_to_ptr.vmem [resolvable:$true] %s636
          %639 = dma.vmem_to_hbm [thread:$0]  %s637, 128, %s634, %s610
        $region72: #{tpu_custom_call.1} parent=43 // pred_fallthru
          _
      $region44: #{tpu_custom_call.1} parent=5 // pred_fallthru
        _
      %p640 = scmp.le.s32.totalorder 2, %s27
      // Predicated region
      $region73: #{tpu_custom_call.1} parent=5 // pred_check
        %p641 = pneg %p640
      $region74: #{tpu_custom_call.1} parent=5 // pred_check_branch
        %643 = sbr.rel (%p641) target = $region76
      $region75: #{tpu_custom_call.1} parent=5 // pred_region
        %s644 = ssub.s32 %s27, 2
        // Predicated region
        $region77: #{tpu_custom_call.1} parent=75 // pred_check
          %p645 = pneg %p197
        $region78: #{tpu_custom_call.1} parent=75 // pred_check_branch
          %647 = sbr.rel (%p645) target = $region80
        $region79: #{tpu_custom_call.1} parent=75 // pred_region
          %s648 = sand.u32 %s182, 1
          %s649 = scalar_lea.sflag [#allocation4], %s648
          %s650 = sand.u32 %s182, 1
          %s651 = smul.addr %s650, 8
          %s652 = scalar_lea.vmem [#allocation11], %s651
          %653 = dma.done %s649, 128
        $region80: #{tpu_custom_call.1} parent=75 // pred_fallthru
          _
        // Predicated region
        $region81: #{tpu_custom_call.1} parent=75 // pred_check
          %p654 = pneg %p223
        $region82: #{tpu_custom_call.1} parent=75 // pred_check_branch
          %656 = sbr.rel (%p654) target = $region84
        $region83: #{tpu_custom_call.1} parent=75 // pred_region
          %s657 = sand.u32 %s208, 1
          %s658 = scalar_lea.sflag [#allocation13], %s657
          %s659 = sand.u32 %s208, 1
          %s660 = smul.addr %s659, 8
          %s661 = scalar_lea.vmem [#allocation12], %s660
          %662 = dma.done %s658, 128
        $region84: #{tpu_custom_call.1} parent=75 // pred_fallthru
          _
      $region76: #{tpu_custom_call.1} parent=5 // pred_fallthru
        _
    $region6: #{tpu_custom_call.1} parent=1 // loop_footer
      %s31 = sadd.s32 1, %s27
    $region7: #{tpu_custom_call.1} parent=1 // loop_footer_branch
      %26 = sbr.rel target = $region3
    $region8: #{tpu_custom_call.1} parent=1 // loop_exit
      _
    %663 = vsyncpa [#allocation3], 1
    %s664 = scalar_lea.sflag [#allocation3], 1
    %665 = vsyncpa %s664, 1
    %666 = vsyncpa [#allocation6], 1
    %s667 = scalar_lea.sflag [#allocation6], 1
    %668 = vsyncpa %s667, 1
    %669 = vsyncpa [#allocation9], 1
    %670 = vsyncpa [#allocation4], 1
    %s671 = scalar_lea.sflag [#allocation4], 1
    %672 = vsyncpa %s671, 1
    %673 = vsyncpa [#allocation13], 1
    %s674 = scalar_lea.sflag [#allocation13], 1
    %675 = vsyncpa %s674, 1

</llo_original>
